<compile_context>
chip_gen: v6e
topology: v6e:2x2x1
jax: 0.10.0
libtpu: 0.0.40
codegen_flags: <defaults>
</compile_context>

<pallas_src>
import math

import jax
import jax.numpy as jnp
from jax.experimental import pallas as pl
from jax.experimental.pallas import tpu as pltpu


def _round_up(x: int, m: int) -> int:
    return ((x + m - 1) // m) * m


def _softmax_onehot_kernel(inputs_ref, targets_ref, probs_ref, onehot_ref):
    # inputs_ref : (C, TN) float (any float dtype)
    # targets_ref: (1, TN) int32
    # probs_ref  : (C, TN) input dtype
    # onehot_ref : (C, TN) float32
    c, tn = probs_ref.shape

    # Numerically stable softmax over the class (sublane) axis, in f32.
    x = inputs_ref[...].astype(jnp.float32)
    m = jnp.max(x, axis=0, keepdims=True)          # (1, TN)
    e = jnp.exp(x - m)
    s = jnp.sum(e, axis=0, keepdims=True)          # (1, TN)
    p = e * pl.reciprocal(s, approx=True)          # EUP slot; clipped below
    probs_ref[...] = jnp.clip(p, 0.0, 1.0).astype(probs_ref.dtype)

    # One-hot: compare a sublane (class) iota against the targets row.
    t = targets_ref[...]                           # (1, TN), broadcasts over C
    class_ids = jax.lax.broadcasted_iota(jnp.int32, (c, tn), 0)
    onehot_ref[...] = (class_ids == t).astype(onehot_ref.dtype)


def _onehot_kernel(targets_ref, onehot_ref):
    # targets_ref: (1, TN) int32 ; onehot_ref: (C, TN) float32
    c, tn = onehot_ref.shape
    t = targets_ref[...]
    class_ids = jax.lax.broadcasted_iota(jnp.int32, (c, tn), 0)
    onehot_ref[...] = (class_ids == t).astype(onehot_ref.dtype)


def loss_preprocessing(
    inputs,
    targets,
    *,
    inputs_are_logits: bool = True,
    apply_transform: bool = True,
    max_col_tile: int = 32768,
    validate_targets: bool = False,
):
    """JAX / Pallas equivalent of LossPreprocessing.forward.

    inputs : (N, C) float array of logits (or raw values if not logits)
    targets: (N,)   int array of class ids (or float if not logits)
    Returns (probs_or_inputs, targets_transformed) matching the PyTorch module.
    """
    if not inputs_are_logits:
        # PyTorch: inputs.unsqueeze(1), targets.unsqueeze(1)  (pure reshape glue)
        return jnp.expand_dims(inputs, 1), jnp.expand_dims(targets, 1)

    n, c = inputs.shape

    if validate_targets:
        # Debug-only: requires concrete arrays (host sync); do NOT enable under jit.
        n_unique = int(jnp.unique(targets).shape[0])
        if n_unique > c or int(jnp.max(targets)) + 1 > c:
            raise ValueError(
                "The targets should be ordered values of equal length to the "
                "inputs 2nd dimension."
            )

    # --- lane-dense layout: class axis -> sublanes, row axis -> lanes ------
    targets_row = targets.reshape(1, -1).astype(jnp.int32)   # (1, N)
    inputs_t = jnp.transpose(inputs)                          # (C, N)

    # Column (lane) tile: as large as reasonable, multiple of 128.
    n_lane = _round_up(n, 128)
    tn = min(max_col_tile, n_lane)
    # Keep >= 2 grid steps when N allows it so both v7x TensorCores get work.
    if tn >= n_lane and n_lane >= 2 * 128:
        tn = _round_up(math.ceil(n_lane / 2), 128)
    tn = _round_up(tn, 128)

    n_pad = _round_up(n, tn)
    if n_pad != n:
        inputs_t = jnp.pad(inputs_t, ((0, 0), (0, n_pad - n)))
        targets_row = jnp.pad(targets_row, ((0, 0), (0, n_pad - n)))

    grid = (n_pad // tn,)

    if apply_transform:
        probs_t, onehot_t = pl.pallas_call(
            _softmax_onehot_kernel,
            out_shape=(
                jax.ShapeDtypeStruct((c, n_pad), inputs.dtype),
                jax.ShapeDtypeStruct((c, n_pad), jnp.float32),
            ),
            grid_spec=pltpu.PrefetchScalarGridSpec(
                num_scalar_prefetch=0,
                grid=grid,
                in_specs=[
                    pl.BlockSpec((c, tn), lambda i: (0, i)),
                    pl.BlockSpec((1, tn), lambda i: (0, i)),
                ],
                out_specs=[
                    pl.BlockSpec((c, tn), lambda i: (0, i)),
                    pl.BlockSpec((c, tn), lambda i: (0, i)),
                ],
            ),
            compiler_params=pltpu.CompilerParams(
                dimension_semantics=("parallel",),
            ),
        )(inputs_t, targets_row)
        probs = jnp.transpose(probs_t[:, :n])
        onehot = jnp.transpose(onehot_t[:, :n])
        return probs, onehot

    # apply_transform=False: inputs pass through untouched, only one-hot runs.
    onehot_t = pl.pallas_call(
        _onehot_kernel,
        out_shape=jax.ShapeDtypeStruct((c, n_pad), jnp.float32),
        grid_spec=pltpu.PrefetchScalarGridSpec(
            num_scalar_prefetch=0,
            grid=grid,
            in_specs=[pl.BlockSpec((1, tn), lambda i: (0, i))],
            out_specs=pl.BlockSpec((c, tn), lambda i: (0, i)),
        ),
        compiler_params=pltpu.CompilerParams(
            dimension_semantics=("parallel",),
        ),
    )(targets_row)
    onehot = jnp.transpose(onehot_t[:, :n])
    return inputs, onehot


def _reference(inputs, targets):
    p = jax.nn.softmax(inputs, axis=1)
    p = jnp.clip(p, 0.0, 1.0)
    oh = jax.nn.one_hot(targets.reshape(-1), inputs.shape[1], dtype=jnp.float32)
    return p, oh


if __name__ == "__main__":
    key = jax.random.PRNGKey(0)
    k1, k2 = jax.random.split(key)

    # Module-consistent shapes: batch=2, spatial=16x16 pixels flattened into
    # N rows, C=4 classes.
    B, H, W, C = 2, 16, 16, 4
    N = B * H * W  # 512

    inputs = jax.random.normal(k1, (N, C), dtype=jnp.float32)
    targets = jax.random.randint(k2, (N,), 0, C, dtype=jnp.int32)

    # Main path: logits + transform.
    probs, onehot = loss_preprocessing(
        inputs, targets, inputs_are_logits=True, apply_transform=True
    )
    probs = jax.block_until_ready(probs)
    onehot = jax.block_until_ready(onehot)

    ref_probs, ref_onehot = _reference(inputs, targets)
    assert probs.shape == (N, C) and onehot.shape == (N, C)
    # approx=True reciprocal -> ~1e-4 relative error on probabilities.
    assert jnp.allclose(probs, ref_probs, atol=2e-3, rtol=2e-3)
    assert jnp.array_equal(onehot, ref_onehot)

    # Secondary path: logits, no transform (one-hot only).
    raw, onehot2 = loss_preprocessing(
        inputs, targets, inputs_are_logits=True, apply_transform=False
    )
    onehot2 = jax.block_until_ready(onehot2)
    assert jnp.array_equal(raw, inputs)
    assert jnp.array_equal(onehot2, ref_onehot)

    print("KERNEL_OK")
</pallas_src>

<mosaic_0001>
module attributes {stable_mosaic.version = 11 : i64} {
  func.func @_softmax_onehot_kernel(%arg0: i32, %arg1: memref<4x256xf32, #tpu.memory_space<vmem>>, %arg2: memref<1x256xi32, #tpu.memory_space<vmem>>, %arg3: memref<4x256xf32, #tpu.memory_space<vmem>>, %arg4: memref<4x256xf32, #tpu.memory_space<vmem>>) attributes {dimension_semantics = [#tpu.dimension_semantics<parallel>], iteration_bounds = array<i64: 2>, scalar_prefetch = 0 : i64, scratch_operands = 0 : i64, tpu.core_type = #tpu.core_type<tc>, window_params = [{transform_indices = @transform_0, window_bounds = array<i64: 4, 256>}, {transform_indices = @transform_1, window_bounds = array<i64: 1, 256>}, {transform_indices = @transform_2, window_bounds = array<i64: 4, 256>}, {transform_indices = @transform_3, window_bounds = array<i64: 4, 256>}]} {
    %c0 = arith.constant 0 : index
    %c0_0 = arith.constant 0 : index
    %0 = vector.load %arg1[%c0, %c0_0] : memref<4x256xf32, #tpu.memory_space<vmem>>, vector<4x256xf32>
    %cst = arith.constant dense<0xFF800000> : vector<256xf32>
    %1 = vector.multi_reduction <maximumf>, %0, %cst [0] : vector<4x256xf32> to vector<256xf32>
    %2 = vector.shape_cast %1 : vector<256xf32> to vector<1x256xf32>
    %3 = vector.broadcast %2 : vector<1x256xf32> to vector<4x256xf32>
    %4 = arith.subf %0, %3 : vector<4x256xf32>
    %5 = math.exp %4 : vector<4x256xf32>
    %cst_1 = arith.constant dense<0.000000e+00> : vector<256xf32>
    %6 = vector.multi_reduction <add>, %5, %cst_1 [0] : vector<4x256xf32> to vector<256xf32>
    %7 = vector.shape_cast %6 : vector<256xf32> to vector<1x256xf32>
    %8 = tpu.reciprocal %7 {approx = true} : vector<1x256xf32> -> vector<1x256xf32>
    %9 = vector.broadcast %8 : vector<1x256xf32> to vector<4x256xf32>
    %10 = arith.mulf %5, %9 : vector<4x256xf32>
    %cst_2 = arith.constant 0.000000e+00 : f32
    %cst_3 = arith.constant 1.000000e+00 : f32
    %11 = vector.broadcast %cst_2 : f32 to vector<4x256xf32>
    %12 = arith.maximumf %11, %10 : vector<4x256xf32>
    %13 = vector.broadcast %cst_3 : f32 to vector<4x256xf32>
    %14 = arith.minimumf %13, %12 : vector<4x256xf32>
    %c0_4 = arith.constant 0 : index
    %c0_5 = arith.constant 0 : index
    %15 = vector.load %arg3[%c0_4, %c0_5] : memref<4x256xf32, #tpu.memory_space<vmem>>, vector<4x256xf32>
    tpu.vector_store %arg3[%c0_4, %c0_5], %14 {strides = array<i32>} : memref<4x256xf32, #tpu.memory_space<vmem>>, vector<4x256xf32>,
    %c0_6 = arith.constant 0 : index
    %c0_7 = arith.constant 0 : index
    %16 = vector.load %arg2[%c0_6, %c0_7] : memref<1x256xi32, #tpu.memory_space<vmem>>, vector<1x256xi32>
    %17 = tpu.iota {dimensions = array<i32: 0>} : vector<4x256xi32>
    %18 = vector.broadcast %16 : vector<1x256xi32> to vector<4x256xi32>
    %19 = arith.cmpi eq, %17, %18 : vector<4x256xi32>
    %20 = arith.extui %19 : vector<4x256xi1> to vector<4x256xi32>
    %21 = arith.sitofp %20 : vector<4x256xi32> to vector<4x256xf32>
    %c0_8 = arith.constant 0 : index
    %c0_9 = arith.constant 0 : index
    %22 = vector.load %arg4[%c0_8, %c0_9] : memref<4x256xf32, #tpu.memory_space<vmem>>, vector<4x256xf32>
    tpu.vector_store %arg4[%c0_8, %c0_9], %21 {strides = array<i32>} : memref<4x256xf32, #tpu.memory_space<vmem>>, vector<4x256xf32>,
    return
  }
  func.func @transform_0(%arg0: i32) -> (i32, i32) {
    %c0_i32 = arith.constant 0 : i32
    %c0_i32_0 = arith.constant 0 : i32
    return %c0_i32, %arg0 : i32, i32
  }
  func.func @transform_1(%arg0: i32) -> (i32, i32) {
    %c0_i32 = arith.constant 0 : i32
    %c0_i32_0 = arith.constant 0 : i32
    return %c0_i32, %arg0 : i32, i32
  }
  func.func @transform_2(%arg0: i32) -> (i32, i32) {
    %c0_i32 = arith.constant 0 : i32
    %c0_i32_0 = arith.constant 0 : i32
    return %c0_i32, %arg0 : i32, i32
  }
  func.func @transform_3(%arg0: i32) -> (i32, i32) {
    %c0_i32 = arith.constant 0 : i32
    %c0_i32_0 = arith.constant 0 : i32
    return %c0_i32, %arg0 : i32, i32
  }
}

</mosaic_0001>

<llo_original>
// kernel: tpu_custom_call.1
$region0: #{tpu_custom_call.1}
  #allocation0 [shape = 'u32[]', space=smem, size = 0x4, offset = 0x4, fixed_abs, tag = 'smem constant byte address 0x4 - core index']
  #allocation1 [shape = 'u32[144,128]{1,0:T(1,128)}', space=vmem, size = 0x12000, scoped, tag = 'internal scratch']
  %s0 = inlined_call_operand.hbm [shape: f32[4,512], index: 0, kind: input, shape index: {}]
  %s1 = inlined_call_operand.hbm [shape: s32[1,512], index: 1, kind: input, shape index: {}]
  %s2 = inlined_call_operand.hbm [shape: f32[4,512], index: 2, kind: output, shape index: {0}]
  %s3 = inlined_call_operand.hbm [shape: f32[4,512], index: 3, kind: output, shape index: {1}]
  %4 = xla_tuple %s2, %s3
  %s5 = sld [smem:[#allocation0]]
  $region57: #{tpu_custom_call.1} parent=0
    _
  %s7 = ssub.s32 1, %s5
  %s8 = scalar_select 0, %s7, %s5
  $region1: #{tpu_custom_call.1} parent=0
    #allocation2 [shape = 'u8[8192]{0}', space=vmem, size = 0x2000, scoped, tag = 'input window, operand 0']
    #allocation3 [shape = 's32[2]{0}', space=sflag, size = 0x8, scoped, tag = 'scoped memory for tpu_custom_call.1']
    #allocation4 [shape = 's32[2]{0}', space=sflag, size = 0x8, scoped, tag = 'scoped memory for tpu_custom_call.1']
    #allocation5 [shape = 'u8[2048]{0}', space=vmem, size = 0x800, scoped, tag = 'input window, operand 1']
    #allocation6 [shape = 's32[2]{0}', space=sflag, size = 0x8, scoped, tag = 'scoped memory for tpu_custom_call.1']
    #allocation7 [shape = 'u8[8192]{0}', space=vmem, size = 0x2000, scoped, tag = 'output window, operand 0']
    #allocation8 [shape = 'u8[8192]{0}', space=vmem, size = 0x2000, scoped, tag = 'output window, operand 1']
    #allocation9 [shape = 's32[2]{0}', space=sflag, size = 0x8, scoped, tag = 'scoped memory for tpu_custom_call.1']
    %9 = vsyncpa [#allocation3], 0
    %s10 = scalar_lea.sflag [#allocation3], 1
    %11 = vsyncpa %s10, 0
    %12 = vsyncpa [#allocation6], 0
    %s13 = scalar_lea.sflag [#allocation6], 1
    %14 = vsyncpa %s13, 0
    %15 = vsyncpa [#allocation4], 0
    %s16 = scalar_lea.sflag [#allocation4], 1
    %17 = vsyncpa %s16, 0
    %18 = vsyncpa [#allocation9], 0
    %s19 = scalar_lea.sflag [#allocation9], 1
    %20 = vsyncpa %s19, 0
    loop: start=0, step=1, limit=4
    $region2: #{tpu_custom_call.1} parent=1 // loop_pre_header
      _
    $region3: #{tpu_custom_call.1} parent=1 // loop_header
      %s22 = sphi 0, %s26
      %p23 = scmp.ge.s32.totalorder %s22, 4
      %s32 = sphi 0, %s34
      %s35 = sphi 0, %s32
      %s36 = sphi 0, %s35
      %s52 = sphi 0, %s36
      %s58 = sphi 0, %s60
      %s61 = sphi 0, %s58
      %s62 = sphi 0, %s61
      %s78 = sphi 0, %s62
      %s84 = sphi 0, %s86
      %s87 = sphi 0, %s84
      %s88 = sphi 0, %s87
      %s104 = sphi 0, %s88
      %s110 = sphi 0, %s112
      %s113 = sphi 0, %s110
      %s114 = sphi 0, %s113
      %s130 = sphi 0, %s114
    $region4: #{tpu_custom_call.1} parent=1 // loop_header_branch
      %25 = sbr.rel (%p23) target = $region8
    $region5: #{tpu_custom_call.1} parent=1 // loop_body
      %s27 = ssub.s32 %s22, 1
      %s28 = ssub.s32 %s22, 2
      %s29 = sadd.s32 %s22, 1
      %s30 = ssub.s32 %s22, %s29
      %p31 = scmp.eq.s32.totalorder %s30, 0
      %s33 = sadd.s32 %s32, 1
      %s34 = scalar_select %p31, %s32, %s33
      %p37 = pneg %p31
      %p38 = scmp.eq.s32.totalorder %s22, 1
      %p39 = por %p37, %p38
      %p40 = scmp.ne.s32.totalorder %s32, %s35
      %p41 = scmp.eq.s32.totalorder %s22, 0
      %p42 = por %p40, %p41
      %p43 = scmp.ne.s32.totalorder %s32, %s35
      %p44 = scmp.eq.s32.totalorder %s27, 1
      %p45 = por %p43, %p44
      %p46 = scmp.ne.s32.totalorder %s35, %s36
      %p47 = scmp.eq.s32.totalorder %s27, 0
      %p48 = por %p46, %p47
      %p49 = scmp.ne.s32.totalorder %s35, %s36
      %p50 = scmp.eq.s32.totalorder %s28, 1
      %p51 = por %p49, %p50
      %p53 = scmp.ne.s32.totalorder %s36, %s52
      %p54 = scmp.eq.s32.totalorder %s28, 0
      %p55 = por %p53, %p54
      %s56 = ssub.s32 %s22, %s29
      %p57 = scmp.eq.s32.totalorder %s56, 0
      %s59 = sadd.s32 %s58, 1
      %s60 = scalar_select %p57, %s58, %s59
      %p63 = pneg %p57
      %p64 = scmp.eq.s32.totalorder %s22, 1
      %p65 = por %p63, %p64
      %p66 = scmp.ne.s32.totalorder %s58, %s61
      %p67 = scmp.eq.s32.totalorder %s22, 0
      %p68 = por %p66, %p67
      %p69 = scmp.ne.s32.totalorder %s58, %s61
      %p70 = scmp.eq.s32.totalorder %s27, 1
      %p71 = por %p69, %p70
      %p72 = scmp.ne.s32.totalorder %s61, %s62
      %p73 = scmp.eq.s32.totalorder %s27, 0
      %p74 = por %p72, %p73
      %p75 = scmp.ne.s32.totalorder %s61, %s62
      %p76 = scmp.eq.s32.totalorder %s28, 1
      %p77 = por %p75, %p76
      %p79 = scmp.ne.s32.totalorder %s62, %s78
      %p80 = scmp.eq.s32.totalorder %s28, 0
      %p81 = por %p79, %p80
      %s82 = ssub.s32 %s22, %s29
      %p83 = scmp.eq.s32.totalorder %s82, 0
      %s85 = sadd.s32 %s84, 1
      %s86 = scalar_select %p83, %s84, %s85
      %p89 = pneg %p83
      %p90 = scmp.eq.s32.totalorder %s22, 1
      %p91 = por %p89, %p90
      %p92 = scmp.ne.s32.totalorder %s84, %s87
      %p93 = scmp.eq.s32.totalorder %s22, 0
      %p94 = por %p92, %p93
      %p95 = scmp.ne.s32.totalorder %s84, %s87
      %p96 = scmp.eq.s32.totalorder %s27, 1
      %p97 = por %p95, %p96
      %p98 = scmp.ne.s32.totalorder %s87, %s88
      %p99 = scmp.eq.s32.totalorder %s27, 0
      %p100 = por %p98, %p99
      %p101 = scmp.ne.s32.totalorder %s87, %s88
      %p102 = scmp.eq.s32.totalorder %s28, 1
      %p103 = por %p101, %p102
      %p105 = scmp.ne.s32.totalorder %s88, %s104
      %p106 = scmp.eq.s32.totalorder %s28, 0
      %p107 = por %p105, %p106
      %s108 = ssub.s32 %s22, %s29
      %p109 = scmp.eq.s32.totalorder %s108, 0
      %s111 = sadd.s32 %s110, 1
      %s112 = scalar_select %p109, %s110, %s111
      %p115 = pneg %p109
      %p116 = scmp.eq.s32.totalorder %s22, 1
      %p117 = por %p115, %p116
      %p118 = scmp.ne.s32.totalorder %s110, %s113
      %p119 = scmp.eq.s32.totalorder %s22, 0
      %p120 = por %p118, %p119
      %p121 = scmp.ne.s32.totalorder %s110, %s113
      %p122 = scmp.eq.s32.totalorder %s27, 1
      %p123 = por %p121, %p122
      %p124 = scmp.ne.s32.totalorder %s113, %s114
      %p125 = scmp.eq.s32.totalorder %s27, 0
      %p126 = por %p124, %p125
      %p127 = scmp.ne.s32.totalorder %s113, %s114
      %p128 = scmp.eq.s32.totalorder %s28, 1
      %p129 = por %p127, %p128
      %p131 = scmp.ne.s32.totalorder %s114, %s130
      %p132 = scmp.eq.s32.totalorder %s28, 0
      %p133 = por %p131, %p132
      %p134 = scmp.le.s32.totalorder 1, %s22
      %p135 = scmp.lt.s32.totalorder %s22, 3
      %p136 = pnand %p134, %p135
      %p137 = pneg %p136
      // Predicated region
      $region9: #{tpu_custom_call.1} parent=5 // pred_check
        _
      $region10: #{tpu_custom_call.1} parent=5 // pred_check_branch
        %139 = sbr.rel (%p136) target = $region12
      $region11: #{tpu_custom_call.1} parent=5 // pred_region
        %s140 = ssub.s32 %s22, 1
      $region12: #{tpu_custom_call.1} parent=5 // pred_fallthru
        _
      %p141 = scmp.lt.s32.totalorder %s22, 2
      // Predicated region
      $region13: #{tpu_custom_call.1} parent=5 // pred_check
        %p142 = pneg %p141
      $region14: #{tpu_custom_call.1} parent=5 // pred_check_branch
        %144 = sbr.rel (%p142) target = $region16
      $region15: #{tpu_custom_call.1} parent=5 // pred_region
        // Predicated region
        $region17: #{tpu_custom_call.1} parent=15 // pred_check
          %p145 = pneg %p42
        $region18: #{tpu_custom_call.1} parent=15 // pred_check_branch
          %147 = sbr.rel (%p145) target = $region20
        $region19: #{tpu_custom_call.1} parent=15 // pred_region
          %s148 = sand.u32 %s32, 1
          %s149 = scalar_lea.sflag [#allocation3], %s148
          %s150 = sand.u32 %s32, 1
          %s151 = smul.addr %s150, 8
          %s152 = scalar_lea.vmem [#allocation2], %s151
          %s153 = smul.u32 2, %s22
          %s155 = ssub.s32 128, 128
          %156 = vsyncadd %s149, %s155
          %s157 = smul.addr %s153, 64
          %s158 = scalar_lea.hbm %s0, %s157
          %s160 = sshll.u32 %s152, 4
          %s161 = int_to_ptr.vmem [resolvable:$true] %s160
          %163 = dma.hbm_to_vmem [thread:$0]  %s158, 128, %s161, %s149
        $region20: #{tpu_custom_call.1} parent=15 // pred_fallthru
          _
        // Predicated region
        $region21: #{tpu_custom_call.1} parent=15 // pred_check
          %p164 = pneg %p68
        $region22: #{tpu_custom_call.1} parent=15 // pred_check_branch
          %166 = sbr.rel (%p164) target = $region24
        $region23: #{tpu_custom_call.1} parent=15 // pred_region
          %s167 = sand.u32 %s58, 1
          %s168 = scalar_lea.sflag [#allocation6], %s167
          %s169 = sand.u32 %s58, 1
          %s170 = smul.addr %s169, 2
          %s171 = scalar_lea.vmem [#allocation5], %s170
          %s172 = smul.u32 2, %s22
          %s174 = ssub.s32 32, 32
          %175 = vsyncadd %s168, %s174
          %s176 = smul.addr %s172, 16
          %s177 = scalar_lea.hbm %s1, %s176
          %s179 = sshll.u32 %s171, 4
          %s180 = int_to_ptr.vmem [resolvable:$true] %s179
          %182 = dma.hbm_to_vmem [thread:$0]  %s177, 32, %s180, %s168
        $region24: #{tpu_custom_call.1} parent=15 // pred_fallthru
          _
      $region16: #{tpu_custom_call.1} parent=5 // pred_fallthru
        _
      %p183 = scmp.le.s32.totalorder 1, %s22
      %p184 = scmp.lt.s32.totalorder %s22, 3
      %p185 = pnand %p183, %p184
      %p186 = pneg %p185
      // Predicated region
      $region25: #{tpu_custom_call.1} parent=5 // pred_check
        _
      $region26: #{tpu_custom_call.1} parent=5 // pred_check_branch
        %188 = sbr.rel (%p185) target = $region28
      $region27: #{tpu_custom_call.1} parent=5 // pred_region
        %s189 = ssub.s32 %s22, 1
        %s190 = sand.u32 %s35, 1
        %s191 = scalar_lea.sflag [#allocation3], %s190
        %s192 = sand.u32 %s35, 1
        %s193 = smul.addr %s192, 8
        %s194 = scalar_lea.vmem [#allocation2], %s193
        // Predicated region
        $region29: #{tpu_custom_call.1} parent=27 // pred_check
          %p195 = pneg %p48
        $region30: #{tpu_custom_call.1} parent=27 // pred_check_branch
          %197 = sbr.rel (%p195) target = $region32
        $region31: #{tpu_custom_call.1} parent=27 // pred_region
          %198 = dma.done %s191, 128
        $region32: #{tpu_custom_call.1} parent=27 // pred_fallthru
          _
        %s199 = sand.u32 %s61, 1
        %s200 = scalar_lea.sflag [#allocation6], %s199
        %s201 = sand.u32 %s61, 1
        %s202 = smul.addr %s201, 2
        %s203 = scalar_lea.vmem [#allocation5], %s202
        // Predicated region
        $region33: #{tpu_custom_call.1} parent=27 // pred_check
          %p204 = pneg %p74
        $region34: #{tpu_custom_call.1} parent=27 // pred_check_branch
          %206 = sbr.rel (%p204) target = $region36
        $region35: #{tpu_custom_call.1} parent=27 // pred_region
          %207 = dma.done %s200, 32
        $region36: #{tpu_custom_call.1} parent=27 // pred_fallthru
          _
        %s208 = sand.u32 %s35, 1
        %s209 = scalar_lea.sflag [#allocation3], %s208
        %s210 = sand.u32 %s35, 1
        %s211 = smul.addr %s210, 8
        %s212 = scalar_lea.vmem [#allocation2], %s211
        %p213 = pneg %p48
        %p214 = pneg %p45
        %s215 = sand.u32 %s61, 1
        %s216 = scalar_lea.sflag [#allocation6], %s215
        %s217 = sand.u32 %s61, 1
        %s218 = smul.addr %s217, 2
        %s219 = scalar_lea.vmem [#allocation5], %s218
        %p220 = pneg %p74
        %p221 = pneg %p71
        %p222 = pneg %p100
        %p223 = pneg %p97
        %s224 = sand.u32 %s87, 1
        %s225 = scalar_lea.sflag [#allocation4], %s224
        %s226 = sand.u32 %s87, 1
        %s227 = smul.addr %s226, 8
        %s228 = scalar_lea.vmem [#allocation7], %s227
        %p229 = pneg %p126
        %p230 = pneg %p123
        %s231 = sand.u32 %s113, 1
        %s232 = scalar_lea.sflag [#allocation9], %s231
        %s233 = sand.u32 %s113, 1
        %s234 = smul.addr %s233, 8
        %s235 = scalar_lea.vmem [#allocation8], %s234
        %s236 = smul.u32 2, %s27
        %s237 = smul.u32 2, %s27
        %s238 = smul.u32 2, %s27
        %s239 = smul.u32 2, %s27
        %v240 = vld [vmem:[%s194] sm:$0xff]
        %v242 = vcombine.high %v240, %v240
        %vm244 = vcmask 1043456
        %v245 = vsel %vm244, %v240, -inf
        %v246 = vrot.slane %v245, 4
        %v247 = vmax.f32 %v245, %v246
        %v248 = vrot.slane %v247, 2
        %v249 = vmax.f32 %v247, %v248
        %v250 = vrot.slane %v249, 1
        %v251 = vmax.f32 %v249, %v250
        %v252 = vsel %vm244, %v242, -inf
        %v253 = vrot.slane %v252, 4
        %v254 = vmax.f32 %v252, %v253
        %v255 = vrot.slane %v254, 2
        %v256 = vmax.f32 %v254, %v255
        %v257 = vrot.slane %v256, 1
        %v258 = vmax.f32 %v256, %v257
        %v261 = vcombine.low %v251, %v258
        %v263 = vsub.f32 %v240, %v261
        %v264 = vmul.f32 %v263, 1.442695
        %v265 = vpow.pop %v264
        %v267 = vcombine.high %v265, %v265
        %v269 = vsel %vm244, %v265, 0.0
        %v270 = vrot.slane %v269, 4
        %v271 = vadd.f32 %v269, %v270
        %v272 = vrot.slane %v271, 2
        %v273 = vadd.f32 %v271, %v272
        %v274 = vrot.slane %v273, 1
        %v275 = vadd.f32 %v273, %v274
        %v276 = vsel %vm244, %v267, 0.0
        %v277 = vrot.slane %v276, 4
        %v278 = vadd.f32 %v276, %v277
        %v279 = vrot.slane %v278, 2
        %v280 = vadd.f32 %v278, %v279
        %v281 = vrot.slane %v280, 1
        %v282 = vadd.f32 %v280, %v281
        %v283 = vrcp.pop %v275
        %v284 = vrcp.pop %v282
        %v287 = vcombine.low %v283, %v284
        %v289 = vmul.f32 %v265, %v287
        %v290 = vmax.f32 %v289, 0.0
        %v291 = vmin.f32 %v290, 1.0
        %292 = vst [vmem:[%s228] sm:$0xff] %v291
        %v293 = vld [vmem:[%s203] sm:$0x3]
        %v294 = vlaneseq
        %v295 = vshrl.u32 %v294, 7
        %v296 = vlaneseq
        %v297 = vshrl.u32 %v296, 7
        %v298 = vsub.s32 0, %v297
        %v299 = vrot.slane %v293, %v298
        %v300 = vlaneseq
        %v301 = vshrl.u32 %v300, 7
        %v302 = vsub.s32 1, %v301
        %v303 = vrot.slane %v293, %v302
        %vm304 = vcmp.eq.s32.totalorder %v295, %v299
        %vm305 = vcmp.eq.s32.totalorder %v295, %v303
        %v306 = vsel %vm304, 1, 0
        %v307 = vsel %vm305, 1, 0
        %v308 = vcvt.s32.f32 %v306
        %v309 = vcvt.s32.f32 %v307
        %v312 = vcombine.low %v308, %v309
        %314 = vst [vmem:[%s235] sm:$0xff] %v312
        %s315 = sand.u32 %s87, 1
        %s316 = scalar_lea.sflag [#allocation4], %s315
        %s317 = sand.u32 %s87, 1
        %s318 = smul.addr %s317, 8
        %s319 = scalar_lea.vmem [#allocation7], %s318
        %s320 = sand.u32 %s113, 1
        %s321 = scalar_lea.sflag [#allocation9], %s320
        %s322 = sand.u32 %s113, 1
        %s323 = smul.addr %s322, 8
        %s324 = scalar_lea.vmem [#allocation8], %s323
        // Predicated region
        $region37: #{tpu_custom_call.1} parent=27 // pred_check
          %p325 = pneg %p97
        $region38: #{tpu_custom_call.1} parent=27 // pred_check_branch
          %327 = sbr.rel (%p325) target = $region40
        $region39: #{tpu_custom_call.1} parent=27 // pred_region
          %s328 = smul.u32 2, %s27
          %s330 = ssub.s32 128, 128
          %331 = vsyncadd %s316, %s330
          %s332 = smul.addr %s328, 64
          %s333 = scalar_lea.hbm %s2, %s332
          %s335 = sshll.u32 %s319, 4
          %s336 = int_to_ptr.vmem [resolvable:$true] %s335
          %338 = dma.vmem_to_hbm [thread:$0]  %s336, 128, %s333, %s316
        $region40: #{tpu_custom_call.1} parent=27 // pred_fallthru
          _
        // Predicated region
        $region41: #{tpu_custom_call.1} parent=27 // pred_check
          %p339 = pneg %p123
        $region42: #{tpu_custom_call.1} parent=27 // pred_check_branch
          %341 = sbr.rel (%p339) target = $region44
        $region43: #{tpu_custom_call.1} parent=27 // pred_region
          %s342 = smul.u32 2, %s27
          %s344 = ssub.s32 128, 128
          %345 = vsyncadd %s321, %s344
          %s346 = smul.addr %s342, 64
          %s347 = scalar_lea.hbm %s3, %s346
          %s349 = sshll.u32 %s324, 4
          %s350 = int_to_ptr.vmem [resolvable:$true] %s349
          %352 = dma.vmem_to_hbm [thread:$0]  %s350, 128, %s347, %s321
        $region44: #{tpu_custom_call.1} parent=27 // pred_fallthru
          _
      $region28: #{tpu_custom_call.1} parent=5 // pred_fallthru
        _
      %p353 = scmp.le.s32.totalorder 2, %s22
      // Predicated region
      $region45: #{tpu_custom_call.1} parent=5 // pred_check
        %p354 = pneg %p353
      $region46: #{tpu_custom_call.1} parent=5 // pred_check_branch
        %356 = sbr.rel (%p354) target = $region48
      $region47: #{tpu_custom_call.1} parent=5 // pred_region
        %s357 = ssub.s32 %s22, 2
        // Predicated region
        $region49: #{tpu_custom_call.1} parent=47 // pred_check
          %p358 = pneg %p103
        $region50: #{tpu_custom_call.1} parent=47 // pred_check_branch
          %360 = sbr.rel (%p358) target = $region52
        $region51: #{tpu_custom_call.1} parent=47 // pred_region
          %s361 = sand.u32 %s88, 1
          %s362 = scalar_lea.sflag [#allocation4], %s361
          %s363 = sand.u32 %s88, 1
          %s364 = smul.addr %s363, 8
          %s365 = scalar_lea.vmem [#allocation7], %s364
          %366 = dma.done %s362, 128
        $region52: #{tpu_custom_call.1} parent=47 // pred_fallthru
          _
        // Predicated region
        $region53: #{tpu_custom_call.1} parent=47 // pred_check
          %p367 = pneg %p129
        $region54: #{tpu_custom_call.1} parent=47 // pred_check_branch
          %369 = sbr.rel (%p367) target = $region56
        $region55: #{tpu_custom_call.1} parent=47 // pred_region
          %s370 = sand.u32 %s114, 1
          %s371 = scalar_lea.sflag [#allocation9], %s370
          %s372 = sand.u32 %s114, 1
          %s373 = smul.addr %s372, 8
          %s374 = scalar_lea.vmem [#allocation8], %s373
          %375 = dma.done %s371, 128
        $region56: #{tpu_custom_call.1} parent=47 // pred_fallthru
          _
      $region48: #{tpu_custom_call.1} parent=5 // pred_fallthru
        _
    $region6: #{tpu_custom_call.1} parent=1 // loop_footer
      %s26 = sadd.s32 1, %s22
    $region7: #{tpu_custom_call.1} parent=1 // loop_footer_branch
      %21 = sbr.rel target = $region3
    $region8: #{tpu_custom_call.1} parent=1 // loop_exit
      _
    %376 = vsyncpa [#allocation3], 1
    %s377 = scalar_lea.sflag [#allocation3], 1
    %378 = vsyncpa %s377, 1
    %379 = vsyncpa [#allocation6], 1
    %s380 = scalar_lea.sflag [#allocation6], 1
    %381 = vsyncpa %s380, 1
    %382 = vsyncpa [#allocation4], 1
    %s383 = scalar_lea.sflag [#allocation4], 1
    %384 = vsyncpa %s383, 1
    %385 = vsyncpa [#allocation9], 1
    %s386 = scalar_lea.sflag [#allocation9], 1
    %387 = vsyncpa %s386, 1

</llo_original>
